<compile_context>
chip_gen: v6e
topology: v6e:2x2x1
jax: 0.10.0
libtpu: 0.0.40
codegen_flags: <defaults>
</compile_context>

<pallas_src>
import functools

import jax
import jax.numpy as jnp
from jax.experimental import pallas as pl
from jax.experimental.pallas import tpu as pltpu


NETWORK_SIZE = [1, 16, 32, 64, 64]   # [1] + cfg['network_size']
OUT_DIM = NETWORK_SIZE[-1]

PACK = 2                              # rows packed into the lane dim; 2 gives 128-lane
                                      # density at layers 3/4 (4 also works on v6e/v7x)
_DEFAULT_TM = 4096                    # original (unpacked) rows per grid step
_TM_ALIGN = 256                       # keeps (tm//PACK, ...) blocks (8,128)-aligned
_MIN_GRID_STEPS = 4                   # let v7x shard the parallel axis over its 2 TCs
_VMEM_LIMIT_BYTES = 32 * 1024 * 1024  # safe on v5e/v6e (128 MiB) and v7x (64 MiB)


def _cdiv(a, b):
    return -(-a // b)


def _round_up(x, m):
    return _cdiv(x, m) * m


def _has_bf16_vector_units():
    """bf16 VPU/EUP exists on v6e/v7x; stay f32 on v5e and older."""
    try:
        kind = jax.devices()[0].device_kind.lower()
    except Exception:
        return False
    return not any(tag in kind for tag in ("v2", "v3", "v4", "v5"))


def _block_diag(w, p):
    """blockdiag(w, ..., w) with p copies (exact: 0/1 multipliers)."""
    return jnp.kron(jnp.eye(p, dtype=w.dtype), w)


def _dup_matrix(width, p, dtype):
    """Constant 0/1 matrix D such that, in the packed layout [r0 | r1 | ...],
    x @ D == [r0 r0 | r1 r1 | ...]  (the packed form of cat(x, x))."""
    eye = jnp.eye(width, dtype=dtype)
    return _block_diag(jnp.concatenate([eye, eye], axis=1), p)


def _mlp_kernel(x_ref, w1, b1, d1, w2, b2, d2, w3, b3, o_ref, *, compute_dtype):
    """Layers 2-4 of EmbeddingNet on one tile of PACK-packed rows, all in VMEM.

    x_ref : (m, PACK*16) layer-1 output, PACK rows packed per kernel row.
    w*/d* : block-diagonal weights / duplication matrices (already compute_dtype).
    b*    : tiled biases (f32).
    o_ref : (m, PACK*64) lane-dense output slab (no relayout before the store).
    """
    cdt = compute_dtype
    x = x_ref[...]                                                    # (m, 32)

    # layer 2: 16 -> 32, doubling residual (packed widths 32 -> 64)
    pre = jnp.dot(x, w1[...], preferred_element_type=jnp.float32) + b1[...]
    h = jnp.tanh(pre.astype(cdt))                 # single f32->cdt cast per layer
    x = jnp.dot(x, d1[...]) + h                   # cat(x,x) via idle MXU (exact 0/1)

    # layer 3: 32 -> 64, doubling residual (64 -> 128)
    pre = jnp.dot(x, w2[...], preferred_element_type=jnp.float32) + b2[...]
    h = jnp.tanh(pre.astype(cdt))
    x = jnp.dot(x, d2[...]) + h                   # (m, 128): full-lane vregs from here on

    # layer 4: 64 -> 64, same-size residual (128 -> 128)
    pre = jnp.dot(x, w3[...], preferred_element_type=jnp.float32) + b3[...]
    x = jnp.tanh(pre.astype(cdt)) + x

    o_ref[...] = x.astype(o_ref.dtype)


def init_params(key):
    """Deterministic parameter init matching the PyTorch __init__ shapes/stds."""
    params = []
    for i in range(1, len(NETWORK_SIZE)):
        n_in, n_out = NETWORK_SIZE[i - 1], NETWORK_SIZE[i]
        key, kw, kb = jax.random.split(key, 3)
        std_w = 1.0 / jnp.sqrt(jnp.float32(n_in + n_out))
        w = jax.random.normal(kw, (n_in, n_out), jnp.float32) * std_w
        b = jax.random.normal(kb, (1, n_out), jnp.float32)    # std = 1
        params.append((w, b))
    return params


@functools.partial(jax.jit, static_argnames=("tm", "use_bf16", "out_dtype"))
def _embedding_net_pallas(x2, flat_params, *, tm, use_bf16, out_dtype):
    """x2: (R, 1) f32 -> (R, 64) out_dtype via one row-tiled pallas_call."""
    cdt = jnp.bfloat16 if use_bf16 else jnp.float32
    w0, b0, w1, b1, w2, b2, w3, b3 = flat_params

    R = x2.shape[0]
    R_pad = _round_up(R, tm)
    if R_pad != R:
        x2 = jnp.pad(x2, ((0, R_pad - R), (0, 0)))  # pad rows -> garbage, sliced off below

    # Layer 1 (K=1 "matmul" == broadcast multiply) + PACK-row packing in the
    # wrapper: the kernel reads a dense (R/PACK, PACK*16) slab instead of a
    # (tm, 1) block that would pad to 128 lanes in VMEM with a strided DMA.
    h1 = jnp.tanh(x2 * w0 + b0)                                        # (R_pad, 16) f32
    h1 = h1.astype(cdt).reshape(R_pad // PACK, PACK * NETWORK_SIZE[1])

    # Block-diagonal packed weights / duplication matrices, cast to the compute
    # dtype ONCE here (no per-grid-step astype inside the kernel).
    w1_bd = _block_diag(w1.astype(cdt), PACK)                          # (32, 64)
    w2_bd = _block_diag(w2.astype(cdt), PACK)                          # (64, 128)
    w3_bd = _block_diag(w3.astype(cdt), PACK)                          # (128, 128)
    b1_bd = jnp.tile(b1, (1, PACK))                                    # (1, 64)  f32
    b2_bd = jnp.tile(b2, (1, PACK))                                    # (1, 128) f32
    b3_bd = jnp.tile(b3, (1, PACK))                                    # (1, 128) f32
    d1 = _dup_matrix(NETWORK_SIZE[1], PACK, cdt)                       # (32, 64)
    d2 = _dup_matrix(NETWORK_SIZE[2], PACK, cdt)                       # (64, 128)

    operands = (h1, w1_bd, b1_bd, d1, w2_bd, b2_bd, d2, w3_bd, b3_bd)

    m = tm // PACK
    in_specs = [pl.BlockSpec((m, h1.shape[1]), lambda i: (i, 0))]
    in_specs += [pl.BlockSpec(op.shape, lambda i: (0, 0)) for op in operands[1:]]
    out_specs = pl.BlockSpec((m, PACK * OUT_DIM), lambda i: (i, 0))

    out = pl.pallas_call(
        functools.partial(_mlp_kernel, compute_dtype=cdt),
        out_shape=jax.ShapeDtypeStruct((R_pad // PACK, PACK * OUT_DIM), out_dtype),
        grid_spec=pltpu.PrefetchScalarGridSpec(
            num_scalar_prefetch=0,
            grid=(R_pad // tm,),
            in_specs=in_specs,
            out_specs=out_specs,
        ),
        compiler_params=pltpu.CompilerParams(
            dimension_semantics=("parallel",),
            vmem_limit_bytes=_VMEM_LIMIT_BYTES,
        ),
    )(*operands)

    # (R_pad//PACK, PACK*64) is a pure contiguous view of (R_pad, 64).
    return out.reshape(R_pad, OUT_DIM)[:R]


def embedding_net_forward(x, params, *, use_bf16=None, out_dtype=jnp.float32, tm=None):
    """x: (..., 1) float32 -> (..., 64) out_dtype.

    Defaults keep the module's f32 output; on v5e (HBM-write bound once the
    kernel is lane-dense) pass out_dtype=jnp.bfloat16 if the consumer allows it.
    """
    if use_bf16 is None:
        use_bf16 = _has_bf16_vector_units()
    lead_shape = x.shape[:-1]
    x2 = x.reshape(-1, 1).astype(jnp.float32)
    R = x2.shape[0]

    if tm is None:
        tm = _DEFAULT_TM
    # Cap tm so large inputs give >= _MIN_GRID_STEPS grid steps (v7x shards the
    # "parallel" axis over 2 TCs); keep it a multiple of 256 for aligned blocks.
    cap = _round_up(_cdiv(max(R, 1), _MIN_GRID_STEPS), _TM_ALIGN)
    tm = max(_TM_ALIGN, min(_round_up(tm, _TM_ALIGN), cap))

    flat_params = tuple(p for wb in params for p in wb)     # w0,b0,w1,b1,...
    out = _embedding_net_pallas(x2, flat_params, tm=tm, use_bf16=bool(use_bf16),
                                out_dtype=out_dtype)
    return out.reshape(*lead_shape, OUT_DIM)


def embedding_net_reference(x, params):
    """Pure-JAX f32 reference reproducing the PyTorch forward loop."""
    for i in range(1, len(NETWORK_SIZE)):
        w, b = params[i - 1]
        hiden = jnp.tanh(
            jnp.matmul(x, w, precision=jax.lax.Precision.HIGHEST) + b)
        if NETWORK_SIZE[i] == NETWORK_SIZE[i - 1]:
            x = hiden + x
        elif NETWORK_SIZE[i] == 2 * NETWORK_SIZE[i - 1]:
            x = jnp.concatenate([x, x], axis=-1) + hiden
        else:
            x = hiden
    return x


if __name__ == "__main__":
    key = jax.random.PRNGKey(0)
    k_param, k_x = jax.random.split(key)

    params = init_params(k_param)

    # small input: batch=2, atoms=16, neighbors=8, feature=1 -> 256 rows
    x = jax.random.normal(k_x, (2, 16, 8, 1), jnp.float32)
    ref = embedding_net_reference(x, params)

    # 1) f32 path: tight check, valid on every TPU generation.
    out_f32 = jax.block_until_ready(embedding_net_forward(x, params, use_bf16=False))
    assert out_f32.shape == (2, 16, 8, OUT_DIM), out_f32.shape
    err_f32 = float(jnp.max(jnp.abs(out_f32 - ref)))
    assert err_f32 <= 1e-3, err_f32

    # 2) auto path (bf16 stream on v6e/v7x, f32 elsewhere): paired max + mean
    #    checks so bf16 rounding tails don't force a tolerance loose enough to
    #    hide structural bugs (packing / block-diag / residual errors are O(0.1+)).
    out = jax.block_until_ready(embedding_net_forward(x, params))
    assert out.shape == (2, 16, 8, OUT_DIM), out.shape
    max_err = float(jnp.max(jnp.abs(out - ref)))
    mean_err = float(jnp.mean(jnp.abs(out - ref)))
    assert max_err <= 1.5e-1 and mean_err <= 3e-2, (max_err, mean_err)

    print("KERNEL_OK")
</pallas_src>

<mosaic_0001>
module attributes {stable_mosaic.version = 11 : i64} {
  func.func @_mlp_kernel(%arg0: i32, %arg1: memref<128x32xf32, #tpu.memory_space<vmem>>, %arg2: memref<32x64xf32, #tpu.memory_space<vmem>>, %arg3: memref<1x64xf32, #tpu.memory_space<vmem>>, %arg4: memref<32x64xf32, #tpu.memory_space<vmem>>, %arg5: memref<64x128xf32, #tpu.memory_space<vmem>>, %arg6: memref<1x128xf32, #tpu.memory_space<vmem>>, %arg7: memref<64x128xf32, #tpu.memory_space<vmem>>, %arg8: memref<128x128xf32, #tpu.memory_space<vmem>>, %arg9: memref<1x128xf32, #tpu.memory_space<vmem>>, %arg10: memref<128x128xf32, #tpu.memory_space<vmem>>) attributes {dimension_semantics = [#tpu.dimension_semantics<parallel>], iteration_bounds = array<i64: 1>, scalar_prefetch = 0 : i64, scratch_operands = 0 : i64, tpu.core_type = #tpu.core_type<tc>, window_params = [{transform_indices = @transform_0, window_bounds = array<i64: 128, 32>}, {pipeline_mode = #tpu.pipeline_mode<synchronous>, transform_indices = @transform_1, window_bounds = array<i64: 32, 64>}, {pipeline_mode = #tpu.pipeline_mode<synchronous>, transform_indices = @transform_2, window_bounds = array<i64: 1, 64>}, {pipeline_mode = #tpu.pipeline_mode<synchronous>, transform_indices = @transform_3, window_bounds = array<i64: 32, 64>}, {pipeline_mode = #tpu.pipeline_mode<synchronous>, transform_indices = @transform_4, window_bounds = array<i64: 64, 128>}, {pipeline_mode = #tpu.pipeline_mode<synchronous>, transform_indices = @transform_5, window_bounds = array<i64: 1, 128>}, {pipeline_mode = #tpu.pipeline_mode<synchronous>, transform_indices = @transform_6, window_bounds = array<i64: 64, 128>}, {pipeline_mode = #tpu.pipeline_mode<synchronous>, transform_indices = @transform_7, window_bounds = array<i64: 128, 128>}, {pipeline_mode = #tpu.pipeline_mode<synchronous>, transform_indices = @transform_8, window_bounds = array<i64: 1, 128>}, {transform_indices = @transform_9, window_bounds = array<i64: 128, 128>}]} {
    %c0 = arith.constant 0 : index
    %c0_0 = arith.constant 0 : index
    %0 = vector.load %arg1[%c0, %c0_0] : memref<128x32xf32, #tpu.memory_space<vmem>>, vector<128x32xf32>
    %c0_1 = arith.constant 0 : index
    %c0_2 = arith.constant 0 : index
    %1 = vector.load %arg2[%c0_1, %c0_2] : memref<32x64xf32, #tpu.memory_space<vmem>>, vector<32x64xf32>
    %cst = arith.constant dense<0.000000e+00> : vector<128x64xf32>
    %2 = tpu.matmul %0, %1, %cst {dimension_numbers = #tpu.dot_dimension_numbers<[1], [0], [0], [1], [0, 0, 1, 1], [], []>} : vector<128x32xf32>, vector<32x64xf32>, vector<128x64xf32> -> vector<128x64xf32>
    %c0_3 = arith.constant 0 : index
    %c0_4 = arith.constant 0 : index
    %3 = vector.load %arg3[%c0_3, %c0_4] : memref<1x64xf32, #tpu.memory_space<vmem>>, vector<1x64xf32>
    %4 = vector.broadcast %3 : vector<1x64xf32> to vector<128x64xf32>
    %5 = arith.addf %2, %4 : vector<128x64xf32>
    %6 = math.tanh %5 : vector<128x64xf32>
    %c0_5 = arith.constant 0 : index
    %c0_6 = arith.constant 0 : index
    %7 = vector.load %arg4[%c0_5, %c0_6] : memref<32x64xf32, #tpu.memory_space<vmem>>, vector<32x64xf32>
    %cst_7 = arith.constant dense<0.000000e+00> : vector<128x64xf32>
    %8 = tpu.matmul %0, %7, %cst_7 {dimension_numbers = #tpu.dot_dimension_numbers<[1], [0], [0], [1], [0, 0, 1, 1], [], []>} : vector<128x32xf32>, vector<32x64xf32>, vector<128x64xf32> -> vector<128x64xf32>
    %9 = arith.addf %8, %6 : vector<128x64xf32>
    %c0_8 = arith.constant 0 : index
    %c0_9 = arith.constant 0 : index
    %10 = vector.load %arg5[%c0_8, %c0_9] : memref<64x128xf32, #tpu.memory_space<vmem>>, vector<64x128xf32>
    %cst_10 = arith.constant dense<0.000000e+00> : vector<128x128xf32>
    %11 = tpu.matmul %9, %10, %cst_10 {dimension_numbers = #tpu.dot_dimension_numbers<[1], [0], [0], [1], [0, 0, 1, 1], [], []>} : vector<128x64xf32>, vector<64x128xf32>, vector<128x128xf32> -> vector<128x128xf32>
    %c0_11 = arith.constant 0 : index
    %c0_12 = arith.constant 0 : index
    %12 = vector.load %arg6[%c0_11, %c0_12] : memref<1x128xf32, #tpu.memory_space<vmem>>, vector<1x128xf32>
    %13 = vector.broadcast %12 : vector<1x128xf32> to vector<128x128xf32>
    %14 = arith.addf %11, %13 : vector<128x128xf32>
    %15 = math.tanh %14 : vector<128x128xf32>
    %c0_13 = arith.constant 0 : index
    %c0_14 = arith.constant 0 : index
    %16 = vector.load %arg7[%c0_13, %c0_14] : memref<64x128xf32, #tpu.memory_space<vmem>>, vector<64x128xf32>
    %cst_15 = arith.constant dense<0.000000e+00> : vector<128x128xf32>
    %17 = tpu.matmul %9, %16, %cst_15 {dimension_numbers = #tpu.dot_dimension_numbers<[1], [0], [0], [1], [0, 0, 1, 1], [], []>} : vector<128x64xf32>, vector<64x128xf32>, vector<128x128xf32> -> vector<128x128xf32>
    %18 = arith.addf %17, %15 : vector<128x128xf32>
    %c0_16 = arith.constant 0 : index
    %c0_17 = arith.constant 0 : index
    %19 = vector.load %arg8[%c0_16, %c0_17] : memref<128x128xf32, #tpu.memory_space<vmem>>, vector<128x128xf32>
    %cst_18 = arith.constant dense<0.000000e+00> : vector<128x128xf32>
    %20 = tpu.matmul %18, %19, %cst_18 {dimension_numbers = #tpu.dot_dimension_numbers<[1], [0], [0], [1], [0, 0, 1, 1], [], []>} : vector<128x128xf32>, vector<128x128xf32>, vector<128x128xf32> -> vector<128x128xf32>
    %c0_19 = arith.constant 0 : index
    %c0_20 = arith.constant 0 : index
    %21 = vector.load %arg9[%c0_19, %c0_20] : memref<1x128xf32, #tpu.memory_space<vmem>>, vector<1x128xf32>
    %22 = vector.broadcast %21 : vector<1x128xf32> to vector<128x128xf32>
    %23 = arith.addf %20, %22 : vector<128x128xf32>
    %24 = math.tanh %23 : vector<128x128xf32>
    %25 = arith.addf %24, %18 : vector<128x128xf32>
    %c0_21 = arith.constant 0 : index
    %c0_22 = arith.constant 0 : index
    %26 = vector.load %arg10[%c0_21, %c0_22] : memref<128x128xf32, #tpu.memory_space<vmem>>, vector<128x128xf32>
    tpu.vector_store %arg10[%c0_21, %c0_22], %25 {strides = array<i32>} : memref<128x128xf32, #tpu.memory_space<vmem>>, vector<128x128xf32>,
    return
  }
  func.func @transform_0(%arg0: i32) -> (i32, i32) {
    %c0_i32 = arith.constant 0 : i32
    %c0_i32_0 = arith.constant 0 : i32
    return %arg0, %c0_i32 : i32, i32
  }
  func.func @transform_1(%arg0: i32) -> (i32, i32) {
    %c0_i32 = arith.constant 0 : i32
    %c0_i32_0 = arith.constant 0 : i32
    %c0_i32_1 = arith.constant 0 : i32
    return %c0_i32, %c0_i32_0 : i32, i32
  }
  func.func @transform_2(%arg0: i32) -> (i32, i32) {
    %c0_i32 = arith.constant 0 : i32
    %c0_i32_0 = arith.constant 0 : i32
    %c0_i32_1 = arith.constant 0 : i32
    return %c0_i32, %c0_i32_0 : i32, i32
  }
  func.func @transform_3(%arg0: i32) -> (i32, i32) {
    %c0_i32 = arith.constant 0 : i32
    %c0_i32_0 = arith.constant 0 : i32
    %c0_i32_1 = arith.constant 0 : i32
    return %c0_i32, %c0_i32_0 : i32, i32
  }
  func.func @transform_4(%arg0: i32) -> (i32, i32) {
    %c0_i32 = arith.constant 0 : i32
    %c0_i32_0 = arith.constant 0 : i32
    %c0_i32_1 = arith.constant 0 : i32
    return %c0_i32, %c0_i32_0 : i32, i32
  }
  func.func @transform_5(%arg0: i32) -> (i32, i32) {
    %c0_i32 = arith.constant 0 : i32
    %c0_i32_0 = arith.constant 0 : i32
    %c0_i32_1 = arith.constant 0 : i32
    return %c0_i32, %c0_i32_0 : i32, i32
  }
  func.func @transform_6(%arg0: i32) -> (i32, i32) {
    %c0_i32 = arith.constant 0 : i32
    %c0_i32_0 = arith.constant 0 : i32
    %c0_i32_1 = arith.constant 0 : i32
    return %c0_i32, %c0_i32_0 : i32, i32
  }
  func.func @transform_7(%arg0: i32) -> (i32, i32) {
    %c0_i32 = arith.constant 0 : i32
    %c0_i32_0 = arith.constant 0 : i32
    %c0_i32_1 = arith.constant 0 : i32
    return %c0_i32, %c0_i32_0 : i32, i32
  }
  func.func @transform_8(%arg0: i32) -> (i32, i32) {
    %c0_i32 = arith.constant 0 : i32
    %c0_i32_0 = arith.constant 0 : i32
    %c0_i32_1 = arith.constant 0 : i32
    return %c0_i32, %c0_i32_0 : i32, i32
  }
  func.func @transform_9(%arg0: i32) -> (i32, i32) {
    %c0_i32 = arith.constant 0 : i32
    %c0_i32_0 = arith.constant 0 : i32
    return %arg0, %c0_i32 : i32, i32
  }
}

</mosaic_0001>

<llo_original>
// kernel: _embedding_net_pallas.1
$region0: #{_embedding_net_pallas.1}
  #allocation0 [shape = 'u32[]', space=smem, size = 0x4, offset = 0x4, fixed_abs, tag = 'smem constant byte address 0x4 - core index']
  #allocation1 [shape = 'u32[144,128]{1,0:T(1,128)}', space=vmem, size = 0x12000, scoped, tag = 'internal scratch']
  %s0 = inlined_call_operand.vmem [shape: f32[128,32], index: 0, kind: input, shape index: {}]
  %s1 = inlined_call_operand.vmem [shape: f32[32,64], index: 1, kind: input, shape index: {}]
  %s2 = inlined_call_operand.vmem [shape: f32[1,64], index: 2, kind: input, shape index: {}]
  %s3 = inlined_call_operand.vmem [shape: f32[32,64], index: 3, kind: input, shape index: {}]
  %s4 = inlined_call_operand.vmem [shape: f32[64,128], index: 4, kind: input, shape index: {}]
  %s5 = inlined_call_operand.vmem [shape: f32[1,128], index: 5, kind: input, shape index: {}]
  %s6 = inlined_call_operand.vmem [shape: f32[64,128], index: 6, kind: input, shape index: {}]
  %s7 = inlined_call_operand.vmem [shape: f32[128,128], index: 7, kind: input, shape index: {}]
  %s8 = inlined_call_operand.vmem [shape: f32[1,128], index: 8, kind: input, shape index: {}]
  %s9 = inlined_call_operand.vmem [shape: f32[128,128], index: 9, kind: output, shape index: {}]
  %s10 = sld [smem:[#allocation0]]
  $region46: #{_embedding_net_pallas.1} parent=0
    _
  %s12 = ssub.s32 1, %s10
  %s13 = scalar_select 0, %s12, %s10
  // Predicated region
  $region2: #{_embedding_net_pallas.1} parent=0 // pred_check
    _
  $region3: #{_embedding_net_pallas.1} parent=0 // pred_check_branch
    %15 = sbr.rel (0) target = $region5
  $region4: #{_embedding_net_pallas.1} parent=0 // pred_region
    _
  $region5: #{_embedding_net_pallas.1} parent=0 // pred_fallthru
    _
  // Predicated region
  $region6: #{_embedding_net_pallas.1} parent=0 // pred_check
    _
  $region7: #{_embedding_net_pallas.1} parent=0 // pred_check_branch
    %17 = sbr.rel (0) target = $region9
  $region8: #{_embedding_net_pallas.1} parent=0 // pred_region
    _
  $region9: #{_embedding_net_pallas.1} parent=0 // pred_fallthru
    _
  // Predicated region
  $region10: #{_embedding_net_pallas.1} parent=0 // pred_check
    _
  $region11: #{_embedding_net_pallas.1} parent=0 // pred_check_branch
    %19 = sbr.rel (0) target = $region13
  $region12: #{_embedding_net_pallas.1} parent=0 // pred_region
    _
  $region13: #{_embedding_net_pallas.1} parent=0 // pred_fallthru
    _
  // Predicated region
  $region14: #{_embedding_net_pallas.1} parent=0 // pred_check
    _
  $region15: #{_embedding_net_pallas.1} parent=0 // pred_check_branch
    %21 = sbr.rel (0) target = $region17
  $region16: #{_embedding_net_pallas.1} parent=0 // pred_region
    _
  $region17: #{_embedding_net_pallas.1} parent=0 // pred_fallthru
    _
  // Predicated region
  $region18: #{_embedding_net_pallas.1} parent=0 // pred_check
    _
  $region19: #{_embedding_net_pallas.1} parent=0 // pred_check_branch
    %23 = sbr.rel (0) target = $region21
  $region20: #{_embedding_net_pallas.1} parent=0 // pred_region
    _
  $region21: #{_embedding_net_pallas.1} parent=0 // pred_fallthru
    _
  // Predicated region
  $region22: #{_embedding_net_pallas.1} parent=0 // pred_check
    _
  $region23: #{_embedding_net_pallas.1} parent=0 // pred_check_branch
    %25 = sbr.rel (0) target = $region25
  $region24: #{_embedding_net_pallas.1} parent=0 // pred_region
    _
  $region25: #{_embedding_net_pallas.1} parent=0 // pred_fallthru
    _
  // Predicated region
  $region26: #{_embedding_net_pallas.1} parent=0 // pred_check
    _
  $region27: #{_embedding_net_pallas.1} parent=0 // pred_check_branch
    %27 = sbr.rel (0) target = $region29
  $region28: #{_embedding_net_pallas.1} parent=0 // pred_region
    _
  $region29: #{_embedding_net_pallas.1} parent=0 // pred_fallthru
    _
  // Predicated region
  $region30: #{_embedding_net_pallas.1} parent=0 // pred_check
    _
  $region31: #{_embedding_net_pallas.1} parent=0 // pred_check_branch
    %29 = sbr.rel (0) target = $region33
  $region32: #{_embedding_net_pallas.1} parent=0 // pred_region
    _
  $region33: #{_embedding_net_pallas.1} parent=0 // pred_fallthru
    _
  // Predicated region
  $region34: #{_embedding_net_pallas.1} parent=0 // pred_check
    _
  $region35: #{_embedding_net_pallas.1} parent=0 // pred_check_branch
    %31 = sbr.rel (0) target = $region37
  $region36: #{_embedding_net_pallas.1} parent=0 // pred_region
    _
  $region37: #{_embedding_net_pallas.1} parent=0 // pred_fallthru
    _
  %v32 = vld [vmem:[%s0] sm:$0xff]
  %v33 = vld [vmem:[%s0 + $0x8] sm:$0xff]
  %v34 = vld [vmem:[%s0 + $0x10] sm:$0xff]
  %v35 = vld [vmem:[%s0 + $0x18] sm:$0xff]
  %v36 = vld [vmem:[%s0 + $0x20] sm:$0xff]
  %v37 = vld [vmem:[%s0 + $0x28] sm:$0xff]
  %v38 = vld [vmem:[%s0 + $0x30] sm:$0xff]
  %v39 = vld [vmem:[%s0 + $0x38] sm:$0xff]
  %v40 = vld [vmem:[%s0 + $0x40] sm:$0xff]
  %v41 = vld [vmem:[%s0 + $0x48] sm:$0xff]
  %v42 = vld [vmem:[%s0 + $0x50] sm:$0xff]
  %v43 = vld [vmem:[%s0 + $0x58] sm:$0xff]
  %v44 = vld [vmem:[%s0 + $0x60] sm:$0xff]
  %v45 = vld [vmem:[%s0 + $0x68] sm:$0xff]
  %v46 = vld [vmem:[%s0 + $0x70] sm:$0xff]
  %v47 = vld [vmem:[%s0 + $0x78] sm:$0xff]
  %v48 = vld [vmem:[%s1] sm:$0xff]
  %v49 = vld [vmem:[%s1 + $0x8] sm:$0xff]
  %v50 = vld [vmem:[%s1 + $0x10] sm:$0xff]
  %v51 = vld [vmem:[%s1 + $0x18] sm:$0xff]
  %v52 = vld [vmem:[%s2] sm:$0x1]
  %v54 = vlaneseq
  %v55 = vshrl.u32 %v54, 7
  %v56 = vsub.s32 0, %v55
  %v57 = vrot.slane %v52, %v56
  %vm59 = vcmask 261120
  %v61 = vsel %vm59, %v32, 0
  %v64 = vsel %vm59, %v33, 0
  %v67 = vsel %vm59, %v34, 0
  %v70 = vsel %vm59, %v35, 0
  %v73 = vsel %vm59, %v36, 0
  %v76 = vsel %vm59, %v37, 0
  %v79 = vsel %vm59, %v38, 0
  %v82 = vsel %vm59, %v39, 0
  %v85 = vsel %vm59, %v40, 0
  %v88 = vsel %vm59, %v41, 0
  %v91 = vsel %vm59, %v42, 0
  %v94 = vsel %vm59, %v43, 0
  %v97 = vsel %vm59, %v44, 0
  %v100 = vsel %vm59, %v45, 0
  %v103 = vsel %vm59, %v46, 0
  %v106 = vsel %vm59, %v47, 0
  %108 = vmatprep.subr.mxu0 0.0
  %109 = vmatpush1.msra.mxu0 0.0
  %110 = vmatprep.subr.mxu0 0.0
  %111 = vmatpush1.msra.mxu0 0.0
  %112 = vmatprep.subr.mxu0 0.0
  %113 = vmatpush1.msra.mxu0 0.0
  %114 = vmatprep.subr.mxu0 0.0
  %115 = vmatpush1.msra.mxu0 0.0
  %116 = vmatprep.subr.mxu0 0.0
  %117 = vmatpush1.msra.mxu0 0.0
  %118 = vmatprep.subr.mxu0 0.0
  %119 = vmatpush1.msra.mxu0 0.0
  %120 = vmatprep.subr.mxu0 0.0
  %121 = vmatpush1.msra.mxu0 0.0
  %122 = vmatprep.subr.mxu0 0.0
  %123 = vmatpush1.msra.mxu0 0.0
  %124 = vmatprep.subr.mxu0 0.0
  %125 = vmatpush1.msra.mxu0 0.0
  %126 = vmatprep.subr.mxu0 0.0
  %127 = vmatpush1.msra.mxu0 0.0
  %128 = vmatprep.subr.mxu0 0.0
  %129 = vmatpush1.msra.mxu0 0.0
  %130 = vmatprep.subr.mxu0 0.0
  %131 = vmatpush1.msra.mxu0 0.0
  %132 = vmatprep.subr.mxu0 0.0
  %133 = vmatpush1.msra.mxu0 %v51
  %134 = vmatprep.subr.mxu0 0.0
  %135 = vmatpush1.msra.mxu0 %v50
  %136 = vmatprep.subr.mxu0 0.0
  %137 = vmatpush1.msra.mxu0 %v49
  %138 = vmatprep.subr.mxu0 0.0
  %139 = vmatpush1.msra.mxu0 %v48
  %140 = vmatprep.subr.mxu0 0.0
  %141 = vmatpush2.msra.mxu0 0.0
  %142 = vmatprep.subr.mxu0 0.0
  %143 = vmatpush2.msra.mxu0 0.0
  %144 = vmatprep.subr.mxu0 0.0
  %145 = vmatpush2.msra.mxu0 0.0
  %146 = vmatprep.subr.mxu0 0.0
  %147 = vmatpush2.msra.mxu0 0.0
  %148 = vmatprep.subr.mxu0 0.0
  %149 = vmatpush2.msra.mxu0 0.0
  %150 = vmatprep.subr.mxu0 0.0
  %151 = vmatpush2.msra.mxu0 0.0
  %152 = vmatprep.subr.mxu0 0.0
  %153 = vmatpush2.msra.mxu0 0.0
  %154 = vmatprep.subr.mxu0 0.0
  %155 = vmatpush2.msra.mxu0 0.0
  %156 = vmatprep.subr.mxu0 0.0
  %157 = vmatpush2.msra.mxu0 0.0
  %158 = vmatprep.subr.mxu0 0.0
  %159 = vmatpush2.msra.mxu0 0.0
  %160 = vmatprep.subr.mxu0 0.0
  %161 = vmatpush2.msra.mxu0 0.0
  %162 = vmatprep.subr.mxu0 0.0
  %163 = vmatpush2.msra.mxu0 0.0
  %164 = vmatprep.subr.mxu0 0.0
  %165 = vmatpush2.msra.mxu0 0.0
  %166 = vmatprep.subr.mxu0 0.0
  %167 = vmatpush2.msra.mxu0 0.0
  %168 = vmatprep.subr.mxu0 0.0
  %169 = vmatpush2.msra.mxu0 0.0
  %170 = vmatprep.subr.mxu0 0.0
  %171 = vmatpush2.msra.mxu0 0.0
  %172 = vmatprep.mubr.f32.mxu0 0.0
  %173 = vmatmul.mubr.f32.gmra.mxu0 %v61
  %v174 = vpop.f32.mrf.mxu0
  %v175 = vadd.f32 %v57, %v174
  %v176 = vpop.f32.mrf.mxu0
  %177 = vmatprep.mubr.f32.mxu0 0.0
  %178 = vmatmul.mubr.f32.gmra.mxu0 %v64
  %v179 = vpop.f32.mrf.mxu0
  %v180 = vadd.f32 %v57, %v179
  %v181 = vpop.f32.mrf.mxu0
  %182 = vmatprep.mubr.f32.mxu0 0.0
  %183 = vmatmul.mubr.f32.gmra.mxu0 %v67
  %v184 = vpop.f32.mrf.mxu0
  %v185 = vadd.f32 %v57, %v184
  %v186 = vpop.f32.mrf.mxu0
  %187 = vmatprep.mubr.f32.mxu0 0.0
  %188 = vmatmul.mubr.f32.gmra.mxu0 %v70
  %v189 = vpop.f32.mrf.mxu0
  %v190 = vadd.f32 %v57, %v189
  %v191 = vpop.f32.mrf.mxu0
  %192 = vmatprep.mubr.f32.mxu0 0.0
  %193 = vmatmul.mubr.f32.gmra.mxu0 %v73
  %v194 = vpop.f32.mrf.mxu0
  %v195 = vadd.f32 %v57, %v194
  %v196 = vpop.f32.mrf.mxu0
  %197 = vmatprep.mubr.f32.mxu0 0.0
  %198 = vmatmul.mubr.f32.gmra.mxu0 %v76
  %v199 = vpop.f32.mrf.mxu0
  %v200 = vadd.f32 %v57, %v199
  %v201 = vpop.f32.mrf.mxu0
  %202 = vmatprep.mubr.f32.mxu0 0.0
  %203 = vmatmul.mubr.f32.gmra.mxu0 %v79
  %v204 = vpop.f32.mrf.mxu0
  %v205 = vadd.f32 %v57, %v204
  %v206 = vpop.f32.mrf.mxu0
  %207 = vmatprep.mubr.f32.mxu0 0.0
  %208 = vmatmul.mubr.f32.gmra.mxu0 %v82
  %v209 = vpop.f32.mrf.mxu0
  %v210 = vadd.f32 %v57, %v209
  %v211 = vpop.f32.mrf.mxu0
  %212 = vmatprep.mubr.f32.mxu0 0.0
  %213 = vmatmul.mubr.f32.gmra.mxu0 %v85
  %v214 = vpop.f32.mrf.mxu0
  %v215 = vadd.f32 %v57, %v214
  %v216 = vpop.f32.mrf.mxu0
  %217 = vmatprep.mubr.f32.mxu0 0.0
  %218 = vmatmul.mubr.f32.gmra.mxu0 %v88
  %v219 = vpop.f32.mrf.mxu0
  %v220 = vadd.f32 %v57, %v219
  %v221 = vpop.f32.mrf.mxu0
  %222 = vmatprep.mubr.f32.mxu0 0.0
  %223 = vmatmul.mubr.f32.gmra.mxu0 %v91
  %v224 = vpop.f32.mrf.mxu0
  %v225 = vadd.f32 %v57, %v224
  %v226 = vpop.f32.mrf.mxu0
  %227 = vmatprep.mubr.f32.mxu0 0.0
  %228 = vmatmul.mubr.f32.gmra.mxu0 %v94
  %v229 = vpop.f32.mrf.mxu0
  %v230 = vadd.f32 %v57, %v229
  %v231 = vpop.f32.mrf.mxu0
  %232 = vmatprep.mubr.f32.mxu0 0.0
  %233 = vmatmul.mubr.f32.gmra.mxu0 %v97
  %v234 = vpop.f32.mrf.mxu0
  %v235 = vadd.f32 %v57, %v234
  %v236 = vpop.f32.mrf.mxu0
  %237 = vmatprep.mubr.f32.mxu0 0.0
  %238 = vmatmul.mubr.f32.gmra.mxu0 %v100
  %v239 = vpop.f32.mrf.mxu0
  %v240 = vadd.f32 %v57, %v239
  %v241 = vpop.f32.mrf.mxu0
  %242 = vmatprep.mubr.f32.mxu0 0.0
  %243 = vmatmul.mubr.f32.gmra.mxu0 %v103
  %v244 = vpop.f32.mrf.mxu0
  %v245 = vadd.f32 %v57, %v244
  %v246 = vpop.f32.mrf.mxu0
  %247 = vmatprep.mubr.f32.mxu0 0.0
  %248 = vmatmul.mubr.f32.gmra.mxu0 %v106
  %v249 = vpop.f32.mrf.mxu0
  %v250 = vadd.f32 %v57, %v249
  %v251 = vpop.f32.mrf.mxu0
  %252 = vdwg.mxu0
  %v253 = vtanh.pop %v175
  %v254 = vtanh.pop %v180
  %v255 = vtanh.pop %v185
  %v256 = vtanh.pop %v190
  %v257 = vtanh.pop %v195
  %v258 = vtanh.pop %v200
  %v259 = vtanh.pop %v205
  %v260 = vtanh.pop %v210
  %v261 = vtanh.pop %v215
  %v262 = vtanh.pop %v220
  %v263 = vtanh.pop %v225
  %v264 = vtanh.pop %v230
  %v265 = vtanh.pop %v235
  %v266 = vtanh.pop %v240
  %v267 = vtanh.pop %v245
  %v268 = vtanh.pop %v250
  %v269 = vld [vmem:[%s3] sm:$0xff]
  %v270 = vld [vmem:[%s3 + $0x8] sm:$0xff]
  %v271 = vld [vmem:[%s3 + $0x10] sm:$0xff]
  %v272 = vld [vmem:[%s3 + $0x18] sm:$0xff]
  %273 = vmatprep.subr.mxu0 0.0
  %274 = vmatpush1.msra.mxu0 0.0
  %275 = vmatprep.subr.mxu0 0.0
  %276 = vmatpush1.msra.mxu0 0.0
  %277 = vmatprep.subr.mxu0 0.0
  %278 = vmatpush1.msra.mxu0 0.0
  %279 = vmatprep.subr.mxu0 0.0
  %280 = vmatpush1.msra.mxu0 0.0
  %281 = vmatprep.subr.mxu0 0.0
  %282 = vmatpush1.msra.mxu0 0.0
  %283 = vmatprep.subr.mxu0 0.0
  %284 = vmatpush1.msra.mxu0 0.0
  %285 = vmatprep.subr.mxu0 0.0
  %286 = vmatpush1.msra.mxu0 0.0
  %287 = vmatprep.subr.mxu0 0.0
  %288 = vmatpush1.msra.mxu0 0.0
  %289 = vmatprep.subr.mxu0 0.0
  %290 = vmatpush1.msra.mxu0 0.0
  %291 = vmatprep.subr.mxu0 0.0
  %292 = vmatpush1.msra.mxu0 0.0
  %293 = vmatprep.subr.mxu0 0.0
  %294 = vmatpush1.msra.mxu0 0.0
  %295 = vmatprep.subr.mxu0 0.0
  %296 = vmatpush1.msra.mxu0 0.0
  %297 = vmatprep.subr.mxu0 0.0
  %298 = vmatpush1.msra.mxu0 %v272
  %299 = vmatprep.subr.mxu0 0.0
  %300 = vmatpush1.msra.mxu0 %v271
  %301 = vmatprep.subr.mxu0 0.0
  %302 = vmatpush1.msra.mxu0 %v270
  %303 = vmatprep.subr.mxu0 0.0
  %304 = vmatpush1.msra.mxu0 %v269
  %305 = vmatprep.subr.mxu0 0.0
  %306 = vmatpush2.msra.mxu0 0.0
  %307 = vmatprep.subr.mxu0 0.0
  %308 = vmatpush2.msra.mxu0 0.0
  %309 = vmatprep.subr.mxu0 0.0
  %310 = vmatpush2.msra.mxu0 0.0
  %311 = vmatprep.subr.mxu0 0.0
  %312 = vmatpush2.msra.mxu0 0.0
  %313 = vmatprep.subr.mxu0 0.0
  %314 = vmatpush2.msra.mxu0 0.0
  %315 = vmatprep.subr.mxu0 0.0
  %316 = vmatpush2.msra.mxu0 0.0
  %317 = vmatprep.subr.mxu0 0.0
  %318 = vmatpush2.msra.mxu0 0.0
  %319 = vmatprep.subr.mxu0 0.0
  %320 = vmatpush2.msra.mxu0 0.0
  %321 = vmatprep.subr.mxu0 0.0
  %322 = vmatpush2.msra.mxu0 0.0
  %323 = vmatprep.subr.mxu0 0.0
  %324 = vmatpush2.msra.mxu0 0.0
  %325 = vmatprep.subr.mxu0 0.0
  %326 = vmatpush2.msra.mxu0 0.0
  %327 = vmatprep.subr.mxu0 0.0
  %328 = vmatpush2.msra.mxu0 0.0
  %329 = vmatprep.subr.mxu0 0.0
  %330 = vmatpush2.msra.mxu0 0.0
  %331 = vmatprep.subr.mxu0 0.0
  %332 = vmatpush2.msra.mxu0 0.0
  %333 = vmatprep.subr.mxu0 0.0
  %334 = vmatpush2.msra.mxu0 0.0
  %335 = vmatprep.subr.mxu0 0.0
  %336 = vmatpush2.msra.mxu0 0.0
  %337 = vmatprep.mubr.f32.mxu0 0.0
  %338 = vmatmul.mubr.f32.gmra.mxu0 %v61
  %v339 = vpop.f32.mrf.mxu0
  %v340 = vadd.f32 %v253, %v339
  %v341 = vpop.f32.mrf.mxu0
  %342 = vmatprep.mubr.f32.mxu0 0.0
  %343 = vmatmul.mubr.f32.gmra.mxu0 %v64
  %v344 = vpop.f32.mrf.mxu0
  %v345 = vadd.f32 %v254, %v344
  %v346 = vpop.f32.mrf.mxu0
  %347 = vmatprep.mubr.f32.mxu0 0.0
  %348 = vmatmul.mubr.f32.gmra.mxu0 %v67
  %v349 = vpop.f32.mrf.mxu0
  %v350 = vadd.f32 %v255, %v349
  %v351 = vpop.f32.mrf.mxu0
  %352 = vmatprep.mubr.f32.mxu0 0.0
  %353 = vmatmul.mubr.f32.gmra.mxu0 %v70
  %v354 = vpop.f32.mrf.mxu0
  %v355 = vadd.f32 %v256, %v354
  %v356 = vpop.f32.mrf.mxu0
  %357 = vmatprep.mubr.f32.mxu0 0.0
  %358 = vmatmul.mubr.f32.gmra.mxu0 %v73
  %v359 = vpop.f32.mrf.mxu0
  %v360 = vadd.f32 %v257, %v359
  %v361 = vpop.f32.mrf.mxu0
  %362 = vmatprep.mubr.f32.mxu0 0.0
  %363 = vmatmul.mubr.f32.gmra.mxu0 %v76
  %v364 = vpop.f32.mrf.mxu0
  %v365 = vadd.f32 %v258, %v364
  %v366 = vpop.f32.mrf.mxu0
  %367 = vmatprep.mubr.f32.mxu0 0.0
  %368 = vmatmul.mubr.f32.gmra.mxu0 %v79
  %v369 = vpop.f32.mrf.mxu0
  %v370 = vadd.f32 %v259, %v369
  %v371 = vpop.f32.mrf.mxu0
  %372 = vmatprep.mubr.f32.mxu0 0.0
  %373 = vmatmul.mubr.f32.gmra.mxu0 %v82
  %v374 = vpop.f32.mrf.mxu0
  %v375 = vadd.f32 %v260, %v374
  %v376 = vpop.f32.mrf.mxu0
  %377 = vmatprep.mubr.f32.mxu0 0.0
  %378 = vmatmul.mubr.f32.gmra.mxu0 %v85
  %v379 = vpop.f32.mrf.mxu0
  %v380 = vadd.f32 %v261, %v379
  %v381 = vpop.f32.mrf.mxu0
  %382 = vmatprep.mubr.f32.mxu0 0.0
  %383 = vmatmul.mubr.f32.gmra.mxu0 %v88
  %v384 = vpop.f32.mrf.mxu0
  %v385 = vadd.f32 %v262, %v384
  %v386 = vpop.f32.mrf.mxu0
  %387 = vmatprep.mubr.f32.mxu0 0.0
  %388 = vmatmul.mubr.f32.gmra.mxu0 %v91
  %v389 = vpop.f32.mrf.mxu0
  %v390 = vadd.f32 %v263, %v389
  %v391 = vpop.f32.mrf.mxu0
  %392 = vmatprep.mubr.f32.mxu0 0.0
  %393 = vmatmul.mubr.f32.gmra.mxu0 %v94
  %v394 = vpop.f32.mrf.mxu0
  %v395 = vadd.f32 %v264, %v394
  %v396 = vpop.f32.mrf.mxu0
  %397 = vmatprep.mubr.f32.mxu0 0.0
  %398 = vmatmul.mubr.f32.gmra.mxu0 %v97
  %v399 = vpop.f32.mrf.mxu0
  %v400 = vadd.f32 %v265, %v399
  %v401 = vpop.f32.mrf.mxu0
  %402 = vmatprep.mubr.f32.mxu0 0.0
  %403 = vmatmul.mubr.f32.gmra.mxu0 %v100
  %v404 = vpop.f32.mrf.mxu0
  %v405 = vadd.f32 %v266, %v404
  %v406 = vpop.f32.mrf.mxu0
  %407 = vmatprep.mubr.f32.mxu0 0.0
  %408 = vmatmul.mubr.f32.gmra.mxu0 %v103
  %v409 = vpop.f32.mrf.mxu0
  %v410 = vadd.f32 %v267, %v409
  %v411 = vpop.f32.mrf.mxu0
  %412 = vmatprep.mubr.f32.mxu0 0.0
  %413 = vmatmul.mubr.f32.gmra.mxu0 %v106
  %v414 = vpop.f32.mrf.mxu0
  %v415 = vadd.f32 %v268, %v414
  %v416 = vpop.f32.mrf.mxu0
  %417 = vdwg.mxu0
  %v418 = vld [vmem:[%s4] sm:$0xff]
  %v419 = vld [vmem:[%s4 + $0x8] sm:$0xff]
  %v420 = vld [vmem:[%s4 + $0x10] sm:$0xff]
  %v421 = vld [vmem:[%s4 + $0x18] sm:$0xff]
  %v422 = vld [vmem:[%s4 + $0x20] sm:$0xff]
  %v423 = vld [vmem:[%s4 + $0x28] sm:$0xff]
  %v424 = vld [vmem:[%s4 + $0x30] sm:$0xff]
  %v425 = vld [vmem:[%s4 + $0x38] sm:$0xff]
  %v426 = vld [vmem:[%s5] sm:$0x1]
  %v428 = vlaneseq
  %v429 = vshrl.u32 %v428, 7
  %v430 = vsub.s32 0, %v429
  %v431 = vrot.slane %v426, %v430
  %vm433 = vcmask 523264
  %v435 = vsel %vm433, %v340, 0
  %v438 = vsel %vm433, %v345, 0
  %v441 = vsel %vm433, %v350, 0
  %v444 = vsel %vm433, %v355, 0
  %v447 = vsel %vm433, %v360, 0
  %v450 = vsel %vm433, %v365, 0
  %v453 = vsel %vm433, %v370, 0
  %v456 = vsel %vm433, %v375, 0
  %v459 = vsel %vm433, %v380, 0
  %v462 = vsel %vm433, %v385, 0
  %v465 = vsel %vm433, %v390, 0
  %v468 = vsel %vm433, %v395, 0
  %v471 = vsel %vm433, %v400, 0
  %v474 = vsel %vm433, %v405, 0
  %v477 = vsel %vm433, %v410, 0
  %v480 = vsel %vm433, %v415, 0
  %482 = vmatprep.subr.mxu0 0.0
  %483 = vmatpush1.msra.mxu0 0.0
  %484 = vmatprep.subr.mxu0 0.0
  %485 = vmatpush1.msra.mxu0 0.0
  %486 = vmatprep.subr.mxu0 0.0
  %487 = vmatpush1.msra.mxu0 0.0
  %488 = vmatprep.subr.mxu0 0.0
  %489 = vmatpush1.msra.mxu0 0.0
  %490 = vmatprep.subr.mxu0 0.0
  %491 = vmatpush1.msra.mxu0 0.0
  %492 = vmatprep.subr.mxu0 0.0
  %493 = vmatpush1.msra.mxu0 0.0
  %494 = vmatprep.subr.mxu0 0.0
  %495 = vmatpush1.msra.mxu0 0.0
  %496 = vmatprep.subr.mxu0 0.0
  %497 = vmatpush1.msra.mxu0 0.0
  %498 = vmatprep.subr.mxu0 0.0
  %499 = vmatpush1.msra.mxu0 %v425
  %500 = vmatprep.subr.mxu0 0.0
  %501 = vmatpush1.msra.mxu0 %v424
  %502 = vmatprep.subr.mxu0 0.0
  %503 = vmatpush1.msra.mxu0 %v423
  %504 = vmatprep.subr.mxu0 0.0
  %505 = vmatpush1.msra.mxu0 %v422
  %506 = vmatprep.subr.mxu0 0.0
  %507 = vmatpush1.msra.mxu0 %v421
  %508 = vmatprep.subr.mxu0 0.0
  %509 = vmatpush1.msra.mxu0 %v420
  %510 = vmatprep.subr.mxu0 0.0
  %511 = vmatpush1.msra.mxu0 %v419
  %512 = vmatprep.subr.mxu0 0.0
  %513 = vmatpush1.msra.mxu0 %v418
  %514 = vmatprep.subr.mxu0 0.0
  %515 = vmatpush2.msra.mxu0 0.0
  %516 = vmatprep.subr.mxu0 0.0
  %517 = vmatpush2.msra.mxu0 0.0
  %518 = vmatprep.subr.mxu0 0.0
  %519 = vmatpush2.msra.mxu0 0.0
  %520 = vmatprep.subr.mxu0 0.0
  %521 = vmatpush2.msra.mxu0 0.0
  %522 = vmatprep.subr.mxu0 0.0
  %523 = vmatpush2.msra.mxu0 0.0
  %524 = vmatprep.subr.mxu0 0.0
  %525 = vmatpush2.msra.mxu0 0.0
  %526 = vmatprep.subr.mxu0 0.0
  %527 = vmatpush2.msra.mxu0 0.0
  %528 = vmatprep.subr.mxu0 0.0
  %529 = vmatpush2.msra.mxu0 0.0
  %530 = vmatprep.subr.mxu0 0.0
  %531 = vmatpush2.msra.mxu0 0.0
  %532 = vmatprep.subr.mxu0 0.0
  %533 = vmatpush2.msra.mxu0 0.0
  %534 = vmatprep.subr.mxu0 0.0
  %535 = vmatpush2.msra.mxu0 0.0
  %536 = vmatprep.subr.mxu0 0.0
  %537 = vmatpush2.msra.mxu0 0.0
  %538 = vmatprep.subr.mxu0 0.0
  %539 = vmatpush2.msra.mxu0 0.0
  %540 = vmatprep.subr.mxu0 0.0
  %541 = vmatpush2.msra.mxu0 0.0
  %542 = vmatprep.subr.mxu0 0.0
  %543 = vmatpush2.msra.mxu0 0.0
  %544 = vmatprep.subr.mxu0 0.0
  %545 = vmatpush2.msra.mxu0 0.0
  %546 = vmatprep.mubr.f32.mxu0 0.0
  %547 = vmatmul.mubr.f32.gmra.mxu0 %v435
  %v548 = vpop.f32.mrf.mxu0
  %v549 = vadd.f32 %v431, %v548
  %v550 = vpop.f32.mrf.mxu0
  %551 = vmatprep.mubr.f32.mxu0 0.0
  %552 = vmatmul.mubr.f32.gmra.mxu0 %v438
  %v553 = vpop.f32.mrf.mxu0
  %v554 = vadd.f32 %v431, %v553
  %v555 = vpop.f32.mrf.mxu0
  %556 = vmatprep.mubr.f32.mxu0 0.0
  %557 = vmatmul.mubr.f32.gmra.mxu0 %v441
  %v558 = vpop.f32.mrf.mxu0
  %v559 = vadd.f32 %v431, %v558
  %v560 = vpop.f32.mrf.mxu0
  %561 = vmatprep.mubr.f32.mxu0 0.0
  %562 = vmatmul.mubr.f32.gmra.mxu0 %v444
  %v563 = vpop.f32.mrf.mxu0
  %v564 = vadd.f32 %v431, %v563
  %v565 = vpop.f32.mrf.mxu0
  %566 = vmatprep.mubr.f32.mxu0 0.0
  %567 = vmatmul.mubr.f32.gmra.mxu0 %v447
  %v568 = vpop.f32.mrf.mxu0
  %v569 = vadd.f32 %v431, %v568
  %v570 = vpop.f32.mrf.mxu0
  %571 = vmatprep.mubr.f32.mxu0 0.0
  %572 = vmatmul.mubr.f32.gmra.mxu0 %v450
  %v573 = vpop.f32.mrf.mxu0
  %v574 = vadd.f32 %v431, %v573
  %v575 = vpop.f32.mrf.mxu0
  %576 = vmatprep.mubr.f32.mxu0 0.0
  %577 = vmatmul.mubr.f32.gmra.mxu0 %v453
  %v578 = vpop.f32.mrf.mxu0
  %v579 = vadd.f32 %v431, %v578
  %v580 = vpop.f32.mrf.mxu0
  %581 = vmatprep.mubr.f32.mxu0 0.0
  %582 = vmatmul.mubr.f32.gmra.mxu0 %v456
  %v583 = vpop.f32.mrf.mxu0
  %v584 = vadd.f32 %v431, %v583
  %v585 = vpop.f32.mrf.mxu0
  %586 = vmatprep.mubr.f32.mxu0 0.0
  %587 = vmatmul.mubr.f32.gmra.mxu0 %v459
  %v588 = vpop.f32.mrf.mxu0
  %v589 = vadd.f32 %v431, %v588
  %v590 = vpop.f32.mrf.mxu0
  %591 = vmatprep.mubr.f32.mxu0 0.0
  %592 = vmatmul.mubr.f32.gmra.mxu0 %v462
  %v593 = vpop.f32.mrf.mxu0
  %v594 = vadd.f32 %v431, %v593
  %v595 = vpop.f32.mrf.mxu0
  %596 = vmatprep.mubr.f32.mxu0 0.0
  %597 = vmatmul.mubr.f32.gmra.mxu0 %v465
  %v598 = vpop.f32.mrf.mxu0
  %v599 = vadd.f32 %v431, %v598
  %v600 = vpop.f32.mrf.mxu0
  %601 = vmatprep.mubr.f32.mxu0 0.0
  %602 = vmatmul.mubr.f32.gmra.mxu0 %v468
  %v603 = vpop.f32.mrf.mxu0
  %v604 = vadd.f32 %v431, %v603
  %v605 = vpop.f32.mrf.mxu0
  %606 = vmatprep.mubr.f32.mxu0 0.0
  %607 = vmatmul.mubr.f32.gmra.mxu0 %v471
  %v608 = vpop.f32.mrf.mxu0
  %v609 = vadd.f32 %v431, %v608
  %v610 = vpop.f32.mrf.mxu0
  %611 = vmatprep.mubr.f32.mxu0 0.0
  %612 = vmatmul.mubr.f32.gmra.mxu0 %v474
  %v613 = vpop.f32.mrf.mxu0
  %v614 = vadd.f32 %v431, %v613
  %v615 = vpop.f32.mrf.mxu0
  %616 = vmatprep.mubr.f32.mxu0 0.0
  %617 = vmatmul.mubr.f32.gmra.mxu0 %v477
  %v618 = vpop.f32.mrf.mxu0
  %v619 = vadd.f32 %v431, %v618
  %v620 = vpop.f32.mrf.mxu0
  %621 = vmatprep.mubr.f32.mxu0 0.0
  %622 = vmatmul.mubr.f32.gmra.mxu0 %v480
  %v623 = vpop.f32.mrf.mxu0
  %v624 = vadd.f32 %v431, %v623
  %v625 = vpop.f32.mrf.mxu0
  %626 = vdwg.mxu0
  %v627 = vtanh.pop %v549
  %v628 = vtanh.pop %v554
  %v629 = vtanh.pop %v559
  %v630 = vtanh.pop %v564
  %v631 = vtanh.pop %v569
  %v632 = vtanh.pop %v574
  %v633 = vtanh.pop %v579
  %v634 = vtanh.pop %v584
  %v635 = vtanh.pop %v589
  %v636 = vtanh.pop %v594
  %v637 = vtanh.pop %v599
  %v638 = vtanh.pop %v604
  %v639 = vtanh.pop %v609
  %v640 = vtanh.pop %v614
  %v641 = vtanh.pop %v619
  %v642 = vtanh.pop %v624
  %v643 = vld [vmem:[%s6] sm:$0xff]
  %v644 = vld [vmem:[%s6 + $0x8] sm:$0xff]
  %v645 = vld [vmem:[%s6 + $0x10] sm:$0xff]
  %v646 = vld [vmem:[%s6 + $0x18] sm:$0xff]
  %v647 = vld [vmem:[%s6 + $0x20] sm:$0xff]
  %v648 = vld [vmem:[%s6 + $0x28] sm:$0xff]
  %v649 = vld [vmem:[%s6 + $0x30] sm:$0xff]
  %v650 = vld [vmem:[%s6 + $0x38] sm:$0xff]
  %651 = vmatprep.subr.mxu0 0.0
  %652 = vmatpush1.msra.mxu0 0.0
  %653 = vmatprep.subr.mxu0 0.0
  %654 = vmatpush1.msra.mxu0 0.0
  %655 = vmatprep.subr.mxu0 0.0
  %656 = vmatpush1.msra.mxu0 0.0
  %657 = vmatprep.subr.mxu0 0.0
  %658 = vmatpush1.msra.mxu0 0.0
  %659 = vmatprep.subr.mxu0 0.0
  %660 = vmatpush1.msra.mxu0 0.0
  %661 = vmatprep.subr.mxu0 0.0
  %662 = vmatpush1.msra.mxu0 0.0
  %663 = vmatprep.subr.mxu0 0.0
  %664 = vmatpush1.msra.mxu0 0.0
  %665 = vmatprep.subr.mxu0 0.0
  %666 = vmatpush1.msra.mxu0 0.0
  %667 = vmatprep.subr.mxu0 0.0
  %668 = vmatpush1.msra.mxu0 %v650
  %669 = vmatprep.subr.mxu0 0.0
  %670 = vmatpush1.msra.mxu0 %v649
  %671 = vmatprep.subr.mxu0 0.0
  %672 = vmatpush1.msra.mxu0 %v648
  %673 = vmatprep.subr.mxu0 0.0
  %674 = vmatpush1.msra.mxu0 %v647
  %675 = vmatprep.subr.mxu0 0.0
  %676 = vmatpush1.msra.mxu0 %v646
  %677 = vmatprep.subr.mxu0 0.0
  %678 = vmatpush1.msra.mxu0 %v645
  %679 = vmatprep.subr.mxu0 0.0
  %680 = vmatpush1.msra.mxu0 %v644
  %681 = vmatprep.subr.mxu0 0.0
  %682 = vmatpush1.msra.mxu0 %v643
  %683 = vmatprep.subr.mxu0 0.0
  %684 = vmatpush2.msra.mxu0 0.0
  %685 = vmatprep.subr.mxu0 0.0
  %686 = vmatpush2.msra.mxu0 0.0
  %687 = vmatprep.subr.mxu0 0.0
  %688 = vmatpush2.msra.mxu0 0.0
  %689 = vmatprep.subr.mxu0 0.0
  %690 = vmatpush2.msra.mxu0 0.0
  %691 = vmatprep.subr.mxu0 0.0
  %692 = vmatpush2.msra.mxu0 0.0
  %693 = vmatprep.subr.mxu0 0.0
  %694 = vmatpush2.msra.mxu0 0.0
  %695 = vmatprep.subr.mxu0 0.0
  %696 = vmatpush2.msra.mxu0 0.0
  %697 = vmatprep.subr.mxu0 0.0
  %698 = vmatpush2.msra.mxu0 0.0
  %699 = vmatprep.subr.mxu0 0.0
  %700 = vmatpush2.msra.mxu0 0.0
  %701 = vmatprep.subr.mxu0 0.0
  %702 = vmatpush2.msra.mxu0 0.0
  %703 = vmatprep.subr.mxu0 0.0
  %704 = vmatpush2.msra.mxu0 0.0
  %705 = vmatprep.subr.mxu0 0.0
  %706 = vmatpush2.msra.mxu0 0.0
  %707 = vmatprep.subr.mxu0 0.0
  %708 = vmatpush2.msra.mxu0 0.0
  %709 = vmatprep.subr.mxu0 0.0
  %710 = vmatpush2.msra.mxu0 0.0
  %711 = vmatprep.subr.mxu0 0.0
  %712 = vmatpush2.msra.mxu0 0.0
  %713 = vmatprep.subr.mxu0 0.0
  %714 = vmatpush2.msra.mxu0 0.0
  %715 = vmatprep.mubr.f32.mxu0 0.0
  %716 = vmatmul.mubr.f32.gmra.mxu0 %v435
  %v717 = vpop.f32.mrf.mxu0
  %v718 = vadd.f32 %v627, %v717
  %v719 = vpop.f32.mrf.mxu0
  %720 = vmatprep.mubr.f32.mxu0 0.0
  %721 = vmatmul.mubr.f32.gmra.mxu0 %v438
  %v722 = vpop.f32.mrf.mxu0
  %v723 = vadd.f32 %v628, %v722
  %v724 = vpop.f32.mrf.mxu0
  %725 = vmatprep.mubr.f32.mxu0 0.0
  %726 = vmatmul.mubr.f32.gmra.mxu0 %v441
  %v727 = vpop.f32.mrf.mxu0
  %v728 = vadd.f32 %v629, %v727
  %v729 = vpop.f32.mrf.mxu0
  %730 = vmatprep.mubr.f32.mxu0 0.0
  %731 = vmatmul.mubr.f32.gmra.mxu0 %v444
  %v732 = vpop.f32.mrf.mxu0
  %v733 = vadd.f32 %v630, %v732
  %v734 = vpop.f32.mrf.mxu0
  %735 = vmatprep.mubr.f32.mxu0 0.0
  %736 = vmatmul.mubr.f32.gmra.mxu0 %v447
  %v737 = vpop.f32.mrf.mxu0
  %v738 = vadd.f32 %v631, %v737
  %v739 = vpop.f32.mrf.mxu0
  %740 = vmatprep.mubr.f32.mxu0 0.0
  %741 = vmatmul.mubr.f32.gmra.mxu0 %v450
  %v742 = vpop.f32.mrf.mxu0
  %v743 = vadd.f32 %v632, %v742
  %v744 = vpop.f32.mrf.mxu0
  %745 = vmatprep.mubr.f32.mxu0 0.0
  %746 = vmatmul.mubr.f32.gmra.mxu0 %v453
  %v747 = vpop.f32.mrf.mxu0
  %v748 = vadd.f32 %v633, %v747
  %v749 = vpop.f32.mrf.mxu0
  %750 = vmatprep.mubr.f32.mxu0 0.0
  %751 = vmatmul.mubr.f32.gmra.mxu0 %v456
  %v752 = vpop.f32.mrf.mxu0
  %v753 = vadd.f32 %v634, %v752
  %v754 = vpop.f32.mrf.mxu0
  %755 = vmatprep.mubr.f32.mxu0 0.0
  %756 = vmatmul.mubr.f32.gmra.mxu0 %v459
  %v757 = vpop.f32.mrf.mxu0
  %v758 = vadd.f32 %v635, %v757
  %v759 = vpop.f32.mrf.mxu0
  %760 = vmatprep.mubr.f32.mxu0 0.0
  %761 = vmatmul.mubr.f32.gmra.mxu0 %v462
  %v762 = vpop.f32.mrf.mxu0
  %v763 = vadd.f32 %v636, %v762
  %v764 = vpop.f32.mrf.mxu0
  %765 = vmatprep.mubr.f32.mxu0 0.0
  %766 = vmatmul.mubr.f32.gmra.mxu0 %v465
  %v767 = vpop.f32.mrf.mxu0
  %v768 = vadd.f32 %v637, %v767
  %v769 = vpop.f32.mrf.mxu0
  %770 = vmatprep.mubr.f32.mxu0 0.0
  %771 = vmatmul.mubr.f32.gmra.mxu0 %v468
  %v772 = vpop.f32.mrf.mxu0
  %v773 = vadd.f32 %v638, %v772
  %v774 = vpop.f32.mrf.mxu0
  %775 = vmatprep.mubr.f32.mxu0 0.0
  %776 = vmatmul.mubr.f32.gmra.mxu0 %v471
  %v777 = vpop.f32.mrf.mxu0
  %v778 = vadd.f32 %v639, %v777
  %v779 = vpop.f32.mrf.mxu0
  %780 = vmatprep.mubr.f32.mxu0 0.0
  %781 = vmatmul.mubr.f32.gmra.mxu0 %v474
  %v782 = vpop.f32.mrf.mxu0
  %v783 = vadd.f32 %v640, %v782
  %v784 = vpop.f32.mrf.mxu0
  %785 = vmatprep.mubr.f32.mxu0 0.0
  %786 = vmatmul.mubr.f32.gmra.mxu0 %v477
  %v787 = vpop.f32.mrf.mxu0
  %v788 = vadd.f32 %v641, %v787
  %v789 = vpop.f32.mrf.mxu0
  %790 = vmatprep.mubr.f32.mxu0 0.0
  %791 = vmatmul.mubr.f32.gmra.mxu0 %v480
  %v792 = vpop.f32.mrf.mxu0
  %v793 = vadd.f32 %v642, %v792
  %v794 = vpop.f32.mrf.mxu0
  %795 = vdwg.mxu0
  %v796 = vld [vmem:[%s7] sm:$0xff]
  %v797 = vld [vmem:[%s7 + $0x8] sm:$0xff]
  %v798 = vld [vmem:[%s7 + $0x10] sm:$0xff]
  %v799 = vld [vmem:[%s7 + $0x18] sm:$0xff]
  %v800 = vld [vmem:[%s7 + $0x20] sm:$0xff]
  %v801 = vld [vmem:[%s7 + $0x28] sm:$0xff]
  %v802 = vld [vmem:[%s7 + $0x30] sm:$0xff]
  %v803 = vld [vmem:[%s7 + $0x38] sm:$0xff]
  %v804 = vld [vmem:[%s7 + $0x40] sm:$0xff]
  %v805 = vld [vmem:[%s7 + $0x48] sm:$0xff]
  %v806 = vld [vmem:[%s7 + $0x50] sm:$0xff]
  %v807 = vld [vmem:[%s7 + $0x58] sm:$0xff]
  %v808 = vld [vmem:[%s7 + $0x60] sm:$0xff]
  %v809 = vld [vmem:[%s7 + $0x68] sm:$0xff]
  %v810 = vld [vmem:[%s7 + $0x70] sm:$0xff]
  %v811 = vld [vmem:[%s7 + $0x78] sm:$0xff]
  %v812 = vld [vmem:[%s8] sm:$0x1]
  %v814 = vlaneseq
  %v815 = vshrl.u32 %v814, 7
  %v816 = vsub.s32 0, %v815
  %v817 = vrot.slane %v812, %v816
  %819 = vmatprep.subr.mxu0 0.0
  %820 = vmatpush1.msra.mxu0 %v811
  %821 = vmatprep.subr.mxu0 0.0
  %822 = vmatpush1.msra.mxu0 %v810
  %823 = vmatprep.subr.mxu0 0.0
  %824 = vmatpush1.msra.mxu0 %v809
  %825 = vmatprep.subr.mxu0 0.0
  %826 = vmatpush1.msra.mxu0 %v808
  %827 = vmatprep.subr.mxu0 0.0
  %828 = vmatpush1.msra.mxu0 %v807
  %829 = vmatprep.subr.mxu0 0.0
  %830 = vmatpush1.msra.mxu0 %v806
  %831 = vmatprep.subr.mxu0 0.0
  %832 = vmatpush1.msra.mxu0 %v805
  %833 = vmatprep.subr.mxu0 0.0
  %834 = vmatpush1.msra.mxu0 %v804
  %835 = vmatprep.subr.mxu0 0.0
  %836 = vmatpush1.msra.mxu0 %v803
  %837 = vmatprep.subr.mxu0 0.0
  %838 = vmatpush1.msra.mxu0 %v802
  %839 = vmatprep.subr.mxu0 0.0
  %840 = vmatpush1.msra.mxu0 %v801
  %841 = vmatprep.subr.mxu0 0.0
  %842 = vmatpush1.msra.mxu0 %v800
  %843 = vmatprep.subr.mxu0 0.0
  %844 = vmatpush1.msra.mxu0 %v799
  %845 = vmatprep.subr.mxu0 0.0
  %846 = vmatpush1.msra.mxu0 %v798
  %847 = vmatprep.subr.mxu0 0.0
  %848 = vmatpush1.msra.mxu0 %v797
  %849 = vmatprep.subr.mxu0 0.0
  %850 = vmatpush1.msra.mxu0 %v796
  %851 = vmatprep.subr.mxu0 0.0
  %852 = vmatpush2.msra.mxu0 0.0
  %853 = vmatprep.subr.mxu0 0.0
  %854 = vmatpush2.msra.mxu0 0.0
  %855 = vmatprep.subr.mxu0 0.0
  %856 = vmatpush2.msra.mxu0 0.0
  %857 = vmatprep.subr.mxu0 0.0
  %858 = vmatpush2.msra.mxu0 0.0
  %859 = vmatprep.subr.mxu0 0.0
  %860 = vmatpush2.msra.mxu0 0.0
  %861 = vmatprep.subr.mxu0 0.0
  %862 = vmatpush2.msra.mxu0 0.0
  %863 = vmatprep.subr.mxu0 0.0
  %864 = vmatpush2.msra.mxu0 0.0
  %865 = vmatprep.subr.mxu0 0.0
  %866 = vmatpush2.msra.mxu0 0.0
  %867 = vmatprep.subr.mxu0 0.0
  %868 = vmatpush2.msra.mxu0 0.0
  %869 = vmatprep.subr.mxu0 0.0
  %870 = vmatpush2.msra.mxu0 0.0
  %871 = vmatprep.subr.mxu0 0.0
  %872 = vmatpush2.msra.mxu0 0.0
  %873 = vmatprep.subr.mxu0 0.0
  %874 = vmatpush2.msra.mxu0 0.0
  %875 = vmatprep.subr.mxu0 0.0
  %876 = vmatpush2.msra.mxu0 0.0
  %877 = vmatprep.subr.mxu0 0.0
  %878 = vmatpush2.msra.mxu0 0.0
  %879 = vmatprep.subr.mxu0 0.0
  %880 = vmatpush2.msra.mxu0 0.0
  %881 = vmatprep.subr.mxu0 0.0
  %882 = vmatpush2.msra.mxu0 0.0
  %883 = vmatprep.mubr.f32.mxu0 0.0
  %884 = vmatmul.mubr.f32.gmra.mxu0 %v718
  %v885 = vpop.f32.mrf.mxu0
  %v886 = vadd.f32 %v817, %v885
  %v887 = vpop.f32.mrf.mxu0
  %888 = vmatprep.mubr.f32.mxu0 0.0
  %889 = vmatmul.mubr.f32.gmra.mxu0 %v723
  %v890 = vpop.f32.mrf.mxu0
  %v891 = vadd.f32 %v817, %v890
  %v892 = vpop.f32.mrf.mxu0
  %893 = vmatprep.mubr.f32.mxu0 0.0
  %894 = vmatmul.mubr.f32.gmra.mxu0 %v728
  %v895 = vpop.f32.mrf.mxu0
  %v896 = vadd.f32 %v817, %v895
  %v897 = vpop.f32.mrf.mxu0
  %898 = vmatprep.mubr.f32.mxu0 0.0
  %899 = vmatmul.mubr.f32.gmra.mxu0 %v733
  %v900 = vpop.f32.mrf.mxu0
  %v901 = vadd.f32 %v817, %v900
  %v902 = vpop.f32.mrf.mxu0
  %903 = vmatprep.mubr.f32.mxu0 0.0
  %904 = vmatmul.mubr.f32.gmra.mxu0 %v738
  %v905 = vpop.f32.mrf.mxu0
  %v906 = vadd.f32 %v817, %v905
  %v907 = vpop.f32.mrf.mxu0
  %908 = vmatprep.mubr.f32.mxu0 0.0
  %909 = vmatmul.mubr.f32.gmra.mxu0 %v743
  %v910 = vpop.f32.mrf.mxu0
  %v911 = vadd.f32 %v817, %v910
  %v912 = vpop.f32.mrf.mxu0
  %913 = vmatprep.mubr.f32.mxu0 0.0
  %914 = vmatmul.mubr.f32.gmra.mxu0 %v748
  %v915 = vpop.f32.mrf.mxu0
  %v916 = vadd.f32 %v817, %v915
  %v917 = vpop.f32.mrf.mxu0
  %918 = vmatprep.mubr.f32.mxu0 0.0
  %919 = vmatmul.mubr.f32.gmra.mxu0 %v753
  %v920 = vpop.f32.mrf.mxu0
  %v921 = vadd.f32 %v817, %v920
  %v922 = vpop.f32.mrf.mxu0
  %923 = vmatprep.mubr.f32.mxu0 0.0
  %924 = vmatmul.mubr.f32.gmra.mxu0 %v758
  %v925 = vpop.f32.mrf.mxu0
  %v926 = vadd.f32 %v817, %v925
  %v927 = vpop.f32.mrf.mxu0
  %928 = vmatprep.mubr.f32.mxu0 0.0
  %929 = vmatmul.mubr.f32.gmra.mxu0 %v763
  %v930 = vpop.f32.mrf.mxu0
  %v931 = vadd.f32 %v817, %v930
  %v932 = vpop.f32.mrf.mxu0
  %933 = vmatprep.mubr.f32.mxu0 0.0
  %934 = vmatmul.mubr.f32.gmra.mxu0 %v768
  %v935 = vpop.f32.mrf.mxu0
  %v936 = vadd.f32 %v817, %v935
  %v937 = vpop.f32.mrf.mxu0
  %938 = vmatprep.mubr.f32.mxu0 0.0
  %939 = vmatmul.mubr.f32.gmra.mxu0 %v773
  %v940 = vpop.f32.mrf.mxu0
  %v941 = vadd.f32 %v817, %v940
  %v942 = vpop.f32.mrf.mxu0
  %943 = vmatprep.mubr.f32.mxu0 0.0
  %944 = vmatmul.mubr.f32.gmra.mxu0 %v778
  %v945 = vpop.f32.mrf.mxu0
  %v946 = vadd.f32 %v817, %v945
  %v947 = vpop.f32.mrf.mxu0
  %948 = vmatprep.mubr.f32.mxu0 0.0
  %949 = vmatmul.mubr.f32.gmra.mxu0 %v783
  %v950 = vpop.f32.mrf.mxu0
  %v951 = vadd.f32 %v817, %v950
  %v952 = vpop.f32.mrf.mxu0
  %953 = vmatprep.mubr.f32.mxu0 0.0
  %954 = vmatmul.mubr.f32.gmra.mxu0 %v788
  %v955 = vpop.f32.mrf.mxu0
  %v956 = vadd.f32 %v817, %v955
  %v957 = vpop.f32.mrf.mxu0
  %958 = vmatprep.mubr.f32.mxu0 0.0
  %959 = vmatmul.mubr.f32.gmra.mxu0 %v793
  %v960 = vpop.f32.mrf.mxu0
  %v961 = vadd.f32 %v817, %v960
  %v962 = vpop.f32.mrf.mxu0
  %963 = vdwg.mxu0
  %v964 = vtanh.pop %v886
  %v965 = vtanh.pop %v891
  %v966 = vtanh.pop %v896
  %v967 = vtanh.pop %v901
  %v968 = vtanh.pop %v906
  %v969 = vtanh.pop %v911
  %v970 = vtanh.pop %v916
  %v971 = vtanh.pop %v921
  %v972 = vtanh.pop %v926
  %v973 = vtanh.pop %v931
  %v974 = vtanh.pop %v936
  %v975 = vtanh.pop %v941
  %v976 = vtanh.pop %v946
  %v977 = vtanh.pop %v951
  %v978 = vtanh.pop %v956
  %v979 = vtanh.pop %v961
  %v980 = vadd.f32 %v964, %v718
  %v981 = vadd.f32 %v965, %v723
  %v982 = vadd.f32 %v966, %v728
  %v983 = vadd.f32 %v967, %v733
  %v984 = vadd.f32 %v968, %v738
  %v985 = vadd.f32 %v969, %v743
  %v986 = vadd.f32 %v970, %v748
  %v987 = vadd.f32 %v971, %v753
  %v988 = vadd.f32 %v972, %v758
  %v989 = vadd.f32 %v973, %v763
  %v990 = vadd.f32 %v974, %v768
  %v991 = vadd.f32 %v975, %v773
  %v992 = vadd.f32 %v976, %v778
  %v993 = vadd.f32 %v977, %v783
  %v994 = vadd.f32 %v978, %v788
  %v995 = vadd.f32 %v979, %v793
  %996 = vst [vmem:[%s9] sm:$0xff] %v980
  %997 = vst [vmem:[%s9 + $0x8] sm:$0xff] %v981
  %998 = vst [vmem:[%s9 + $0x10] sm:$0xff] %v982
  %999 = vst [vmem:[%s9 + $0x18] sm:$0xff] %v983
  %1000 = vst [vmem:[%s9 + $0x20] sm:$0xff] %v984
  %1001 = vst [vmem:[%s9 + $0x28] sm:$0xff] %v985
  %1002 = vst [vmem:[%s9 + $0x30] sm:$0xff] %v986
  %1003 = vst [vmem:[%s9 + $0x38] sm:$0xff] %v987
  %1004 = vst [vmem:[%s9 + $0x40] sm:$0xff] %v988
  %1005 = vst [vmem:[%s9 + $0x48] sm:$0xff] %v989
  %1006 = vst [vmem:[%s9 + $0x50] sm:$0xff] %v990
  %1007 = vst [vmem:[%s9 + $0x58] sm:$0xff] %v991
  %1008 = vst [vmem:[%s9 + $0x60] sm:$0xff] %v992
  %1009 = vst [vmem:[%s9 + $0x68] sm:$0xff] %v993
  %1010 = vst [vmem:[%s9 + $0x70] sm:$0xff] %v994
  %1011 = vst [vmem:[%s9 + $0x78] sm:$0xff] %v995
  // Predicated region
  $region38: #{_embedding_net_pallas.1} parent=0 // pred_check
    _
  $region39: #{_embedding_net_pallas.1} parent=0 // pred_check_branch
    %1013 = sbr.rel (0) target = $region41
  $region40: #{_embedding_net_pallas.1} parent=0 // pred_region
    _
  $region41: #{_embedding_net_pallas.1} parent=0 // pred_fallthru
    _
  // Predicated region
  $region42: #{_embedding_net_pallas.1} parent=0 // pred_check
    _
  $region43: #{_embedding_net_pallas.1} parent=0 // pred_check_branch
    %1015 = sbr.rel (0) target = $region45
  $region44: #{_embedding_net_pallas.1} parent=0 // pred_region
    _
  $region45: #{_embedding_net_pallas.1} parent=0 // pred_fallthru
    _

</llo_original>
